<compile_context>
chip_gen: v7x
topology: tpu7x:2x2x1
jax: 0.10.0
libtpu: 0.0.40
codegen_flags: <defaults>
</compile_context>

<pallas_src>
import math

import jax
import jax.numpy as jnp
from jax.experimental import pallas as pl
from jax.experimental.pallas import tpu as pltpu


_INV_SQRT2 = 1.0 / math.sqrt(2.0)


def _round_up(x, m):
    return ((x + m - 1) // m) * m


def _adapter_kernel(x_ref, w1_ref, b1_ref, w2_ref, b2_ref, o_ref):
    """One row tile of: out = x + (GELU(x @ W1 + b1) @ W2 + b2)."""
    x = x_ref[...]                                  # (TM, D), native input dtype
    xc = x.astype(w1_ref.dtype)                     # in-kernel cast: VPU has slack here

    # fc1 on the MXU, f32 accumulation; biases are kept in f32.
    h = jnp.dot(xc, w1_ref[...], preferred_element_type=jnp.float32) + b1_ref[...]

    # Exact (erf-based) GELU — matches torch.nn.GELU() default.
    h = 0.5 * h * (1.0 + jax.lax.erf(h * _INV_SQRT2))

    # fc2 on the MXU, f32 accumulation.
    y = jnp.dot(h.astype(w2_ref.dtype), w2_ref[...],
                preferred_element_type=jnp.float32) + b2_ref[...]

    # Residual in f32; the only narrowing happens at this single store.
    o_ref[...] = (x.astype(jnp.float32) + y).astype(o_ref.dtype)


def adapter_forward(x, w1, b1, w2, b2, *, tile_m=2048, compute_dtype=None,
                    out_dtype=None, even_grid_steps=True):
    """x: (batch, seq, idim). Returns (batch, seq, idim) in `out_dtype`.

    tile_m:        max row tile (large; amortizes ~0.35 us/step fixed overhead).
    compute_dtype: dtype of the matmul operands (weights cast outside, x cast
                   inside the kernel).  Default: x.dtype (exact torch parity).
    out_dtype:     output dtype (e.g. jnp.bfloat16 to halve the HBM write
                   stream).  Default: x.dtype.  Note: bf16 paths will not meet
                   a 1e-5 tolerance vs. an f32 reference.
    """
    batch, seq, idim = x.shape
    bdim = w1.shape[1]
    n = batch * seq

    compute_dtype = jnp.dtype(compute_dtype) if compute_dtype is not None else x.dtype
    out_dtype = jnp.dtype(out_dtype) if out_dtype is not None else x.dtype

    # No wrapper-side pad/cast of the activations — those are un-fused XLA
    # passes over HBM.  reshape of a contiguous array is free.
    x2d = x.reshape(n, idim)
    w1c = w1.astype(compute_dtype)
    w2c = w2.astype(compute_dtype)
    b1f = b1.reshape(1, bdim).astype(jnp.float32)   # biases stay f32 (added to f32 acc)
    b2f = b2.reshape(1, idim).astype(jnp.float32)

    # Row-tile selection: biggest tile <= tile_m (clamped for small inputs),
    # balanced across steps, step count made even when >1 so the "parallel"
    # grid axis splits evenly over v7x's two TensorCores (no effect on the
    # single-TC v5e/v6e, where the grid is a serial loop).
    row_align = 16 if jnp.dtype(x.dtype).itemsize < 4 else 8
    max_tile = max(row_align, _round_up(min(int(tile_m), n), row_align))
    steps = pl.cdiv(n, max_tile)
    if even_grid_steps and steps > 1 and steps % 2 == 1:
        steps += 1
    tile = max(row_align, _round_up(pl.cdiv(n, steps), row_align))
    grid = (pl.cdiv(n, tile),)   # last block may be partial: Pallas masks its writes

    x_bytes = n * idim * jnp.dtype(x.dtype).itemsize
    o_bytes = n * idim * jnp.dtype(out_dtype).itemsize
    w_bytes = 2 * idim * bdim * jnp.dtype(compute_dtype).itemsize + 4 * (idim + bdim)
    cost = pl.CostEstimate(
        flops=4 * n * idim * bdim,          # two matmuls
        transcendentals=n * bdim,           # erf in GELU
        bytes_accessed=x_bytes + o_bytes + w_bytes,
    )

    # Note: weights/biases (~100 KiB even double-buffered) are not a VMEM
    # constraint at these tile sizes, so we skip pl.Buffered(1) single-buffering
    # for the invariant operands.
    out2d = pl.pallas_call(
        _adapter_kernel,
        out_shape=jax.ShapeDtypeStruct((n, idim), out_dtype),
        grid_spec=pltpu.PrefetchScalarGridSpec(
            num_scalar_prefetch=0,
            grid=grid,
            in_specs=[
                pl.BlockSpec((tile, idim), lambda i: (i, 0)),   # x row tile
                pl.BlockSpec((idim, bdim), lambda i: (0, 0)),   # W1 (full, resident)
                pl.BlockSpec((1, bdim), lambda i: (0, 0)),      # b1 (full)
                pl.BlockSpec((bdim, idim), lambda i: (0, 0)),   # W2 (full, resident)
                pl.BlockSpec((1, idim), lambda i: (0, 0)),      # b2 (full)
            ],
            out_specs=pl.BlockSpec((tile, idim), lambda i: (i, 0)),
        ),
        compiler_params=pltpu.CompilerParams(
            dimension_semantics=("parallel",),   # shard grid steps across TCs (v7x)
        ),
        cost_estimate=cost,
    )(x2d, w1c, b1f, w2c, b2f)

    return out2d.reshape(batch, seq, idim)


def init_adapter_params(key, idim, bottleneck_dim=None):
    """Deterministic synthetic init matching nn.Linear shapes.

    PyTorch stores Linear weight as (out, in); we keep the (in, out) transpose
    so the kernel can do x @ W directly.  We intentionally do NOT pad idim for
    the HBM-facing layout (padding 160->256 would add 60% HBM bytes to a
    memory-bound kernel); the masked 160-lane tail store has ample slot slack.
    """
    bdim = bottleneck_dim if bottleneck_dim else int(idim // 5)
    k1, k2, k3, k4 = jax.random.split(key, 4)
    lim1 = 1.0 / math.sqrt(idim)
    lim2 = 1.0 / math.sqrt(bdim)
    w1 = jax.random.uniform(k1, (idim, bdim), jnp.float32, -lim1, lim1)
    b1 = jax.random.uniform(k2, (bdim,), jnp.float32, -lim1, lim1)
    w2 = jax.random.uniform(k3, (bdim, idim), jnp.float32, -lim2, lim2)
    b2 = jax.random.uniform(k4, (idim,), jnp.float32, -lim2, lim2)
    return w1, b1, w2, b2


def adapter_reference(x, w1, b1, w2, b2):
    """Pure-JAX reference for correctness checking."""
    h = x @ w1 + b1
    h = 0.5 * h * (1.0 + jax.lax.erf(h / math.sqrt(2.0)))
    return x + (h @ w2 + b2)


if __name__ == "__main__":
    key = jax.random.PRNGKey(0)
    kx, kp, kx2 = jax.random.split(key, 3)

    batch, seq, idim = 2, 8, 160          # bottleneck = idim // 5 = 32
    w1, b1, w2, b2 = init_adapter_params(kp, idim)

    # Small shape: tile clamps to the full row count, single grid step.
    x_small = jax.random.normal(kx, (batch, seq, idim), jnp.float32)
    out_small = jax.block_until_ready(adapter_forward(x_small, w1, b1, w2, b2))
    ref_small = adapter_reference(x_small, w1, b1, w2, b2)
    assert out_small.shape == x_small.shape and out_small.dtype == x_small.dtype
    assert jnp.allclose(out_small, ref_small, atol=1e-5, rtol=1e-5), \
        "small-shape mismatch vs reference"

    # Whisper-like shape: 3000 rows -> 2 balanced steps of 1504 rows, the
    # second one partial (masked writes), no wrapper-side pad/slice/cast.
    x_big = jax.random.normal(kx2, (2, 1500, idim), jnp.float32)
    out_big = jax.block_until_ready(adapter_forward(x_big, w1, b1, w2, b2))
    ref_big = adapter_reference(x_big, w1, b1, w2, b2)
    assert out_big.shape == x_big.shape and out_big.dtype == x_big.dtype
    assert jnp.allclose(out_big, ref_big, atol=1e-5, rtol=1e-5), \
        "large-shape mismatch vs reference"

    # bf16 output path (halves the HBM write stream); f32 compute inside, so
    # only the final store narrows — loosened tolerance vs. the f32 reference.
    out_bf16 = jax.block_until_ready(
        adapter_forward(x_big, w1, b1, w2, b2, out_dtype=jnp.bfloat16))
    assert out_bf16.dtype == jnp.bfloat16
    assert jnp.allclose(out_bf16.astype(jnp.float32), ref_big,
                        atol=5e-2, rtol=5e-2), "bf16-output mismatch vs reference"

    print("KERNEL_OK")
</pallas_src>

<mosaic_0001>
module attributes {stable_mosaic.version = 11 : i64} {
  func.func @_adapter_kernel(%arg0: i32, %arg1: memref<16x160xf32, #tpu.memory_space<vmem>>, %arg2: memref<160x32xf32, #tpu.memory_space<vmem>>, %arg3: memref<1x32xf32, #tpu.memory_space<vmem>>, %arg4: memref<32x160xf32, #tpu.memory_space<vmem>>, %arg5: memref<1x160xf32, #tpu.memory_space<vmem>>, %arg6: memref<16x160xf32, #tpu.memory_space<vmem>>) attributes {dimension_semantics = [#tpu.dimension_semantics<parallel>], iteration_bounds = array<i64: 1>, scalar_prefetch = 0 : i64, scratch_operands = 0 : i64, tpu.core_type = #tpu.core_type<tc>, window_params = [{transform_indices = @transform_0, window_bounds = array<i64: 16, 160>}, {pipeline_mode = #tpu.pipeline_mode<synchronous>, transform_indices = @transform_1, window_bounds = array<i64: 160, 32>}, {pipeline_mode = #tpu.pipeline_mode<synchronous>, transform_indices = @transform_2, window_bounds = array<i64: 1, 32>}, {pipeline_mode = #tpu.pipeline_mode<synchronous>, transform_indices = @transform_3, window_bounds = array<i64: 32, 160>}, {pipeline_mode = #tpu.pipeline_mode<synchronous>, transform_indices = @transform_4, window_bounds = array<i64: 1, 160>}, {transform_indices = @transform_5, window_bounds = array<i64: 16, 160>}]} {
    %c0 = arith.constant 0 : index
    %c0_0 = arith.constant 0 : index
    %0 = vector.load %arg1[%c0, %c0_0] : memref<16x160xf32, #tpu.memory_space<vmem>>, vector<16x160xf32>
    %c0_1 = arith.constant 0 : index
    %c0_2 = arith.constant 0 : index
    %1 = vector.load %arg2[%c0_1, %c0_2] : memref<160x32xf32, #tpu.memory_space<vmem>>, vector<160x32xf32>
    %cst = arith.constant dense<0.000000e+00> : vector<16x32xf32>
    %2 = tpu.matmul %0, %1, %cst {dimension_numbers = #tpu.dot_dimension_numbers<[1], [0], [0], [1], [0, 0, 1, 1], [], []>} : vector<16x160xf32>, vector<160x32xf32>, vector<16x32xf32> -> vector<16x32xf32>
    %c0_3 = arith.constant 0 : index
    %c0_4 = arith.constant 0 : index
    %3 = vector.load %arg3[%c0_3, %c0_4] : memref<1x32xf32, #tpu.memory_space<vmem>>, vector<1x32xf32>
    %4 = vector.broadcast %3 : vector<1x32xf32> to vector<16x32xf32>
    %5 = arith.addf %2, %4 : vector<16x32xf32>
    %cst_5 = arith.constant 5.000000e-01 : f32
    %6 = vector.broadcast %cst_5 : f32 to vector<16x32xf32>
    %7 = arith.mulf %6, %5 : vector<16x32xf32>
    %cst_6 = arith.constant 0.707106769 : f32
    %8 = vector.broadcast %cst_6 : f32 to vector<16x32xf32>
    %9 = arith.mulf %5, %8 : vector<16x32xf32>
    %10 = math.erf %9 : vector<16x32xf32>
    %cst_7 = arith.constant 1.000000e+00 : f32
    %11 = vector.broadcast %cst_7 : f32 to vector<16x32xf32>
    %12 = arith.addf %11, %10 : vector<16x32xf32>
    %13 = arith.mulf %7, %12 : vector<16x32xf32>
    %c0_8 = arith.constant 0 : index
    %c0_9 = arith.constant 0 : index
    %14 = vector.load %arg4[%c0_8, %c0_9] : memref<32x160xf32, #tpu.memory_space<vmem>>, vector<32x160xf32>
    %cst_10 = arith.constant dense<0.000000e+00> : vector<16x160xf32>
    %15 = tpu.matmul %13, %14, %cst_10 {dimension_numbers = #tpu.dot_dimension_numbers<[1], [0], [0], [1], [0, 0, 1, 1], [], []>} : vector<16x32xf32>, vector<32x160xf32>, vector<16x160xf32> -> vector<16x160xf32>
    %c0_11 = arith.constant 0 : index
    %c0_12 = arith.constant 0 : index
    %16 = vector.load %arg5[%c0_11, %c0_12] : memref<1x160xf32, #tpu.memory_space<vmem>>, vector<1x160xf32>
    %17 = vector.broadcast %16 : vector<1x160xf32> to vector<16x160xf32>
    %18 = arith.addf %15, %17 : vector<16x160xf32>
    %19 = arith.addf %0, %18 : vector<16x160xf32>
    %c0_13 = arith.constant 0 : index
    %c0_14 = arith.constant 0 : index
    %20 = vector.load %arg6[%c0_13, %c0_14] : memref<16x160xf32, #tpu.memory_space<vmem>>, vector<16x160xf32>
    tpu.vector_store %arg6[%c0_13, %c0_14], %19 {strides = array<i32>} : memref<16x160xf32, #tpu.memory_space<vmem>>, vector<16x160xf32>,
    return
  }
  func.func @transform_0(%arg0: i32) -> (i32, i32) {
    %c0_i32 = arith.constant 0 : i32
    %c0_i32_0 = arith.constant 0 : i32
    return %arg0, %c0_i32 : i32, i32
  }
  func.func @transform_1(%arg0: i32) -> (i32, i32) {
    %c0_i32 = arith.constant 0 : i32
    %c0_i32_0 = arith.constant 0 : i32
    %c0_i32_1 = arith.constant 0 : i32
    return %c0_i32, %c0_i32_0 : i32, i32
  }
  func.func @transform_2(%arg0: i32) -> (i32, i32) {
    %c0_i32 = arith.constant 0 : i32
    %c0_i32_0 = arith.constant 0 : i32
    %c0_i32_1 = arith.constant 0 : i32
    return %c0_i32, %c0_i32_0 : i32, i32
  }
  func.func @transform_3(%arg0: i32) -> (i32, i32) {
    %c0_i32 = arith.constant 0 : i32
    %c0_i32_0 = arith.constant 0 : i32
    %c0_i32_1 = arith.constant 0 : i32
    return %c0_i32, %c0_i32_0 : i32, i32
  }
  func.func @transform_4(%arg0: i32) -> (i32, i32) {
    %c0_i32 = arith.constant 0 : i32
    %c0_i32_0 = arith.constant 0 : i32
    %c0_i32_1 = arith.constant 0 : i32
    return %c0_i32, %c0_i32_0 : i32, i32
  }
  func.func @transform_5(%arg0: i32) -> (i32, i32) {
    %c0_i32 = arith.constant 0 : i32
    %c0_i32_0 = arith.constant 0 : i32
    return %arg0, %c0_i32 : i32, i32
  }
}

</mosaic_0001>

<llo_original>
// kernel: tpu_custom_call.1
$region0: #{tpu_custom_call.1}
  #allocation0 [shape = 'u32[]', space=smem, size = 0x4, offset = 0x4, fixed_abs, tag = 'smem constant byte address 0x4 - core index']
  #allocation1 [shape = 'u32[144,128]{1,0:T(1,128)}', space=vmem, size = 0x12000, scoped, tag = 'internal scratch']
  %s0 = inlined_call_operand.vmem [shape: f32[16,160], index: 0, kind: input, shape index: {}]
  %s1 = inlined_call_operand.vmem [shape: f32[160,32], index: 1, kind: input, shape index: {}]
  %s2 = inlined_call_operand.vmem [shape: f32[1,32], index: 2, kind: input, shape index: {}]
  %s3 = inlined_call_operand.vmem [shape: f32[32,160], index: 3, kind: input, shape index: {}]
  %s4 = inlined_call_operand.vmem [shape: f32[1,160], index: 4, kind: input, shape index: {}]
  %s5 = inlined_call_operand.hbm [shape: f32[16,160], index: 5, kind: output, shape index: {}]
  %s6 = sld [smem:[#allocation0]]
  $region30: #{tpu_custom_call.1} parent=0
    _
  %s8 = ssub.s32 1, %s6
  %s9 = scalar_select 0, %s8, %s6
  $region1: #{tpu_custom_call.1} parent=0
    #allocation2 [shape = 'u8[16384]{0}', space=vmem, size = 0x4000, scoped, tag = 'output window, operand 0, single buffered']
    #allocation3 [shape = 's32[1]{0}', space=sflag, size = 0x4, scoped, tag = 'scoped memory for tpu_custom_call.1']
    %10 = vsyncpa [#allocation3], 0
    // Predicated region
    $region2: #{tpu_custom_call.1} parent=1 // pred_check
      _
    $region3: #{tpu_custom_call.1} parent=1 // pred_check_branch
      %12 = sbr.rel (0) target = $region5
    $region4: #{tpu_custom_call.1} parent=1 // pred_region
      _
    $region5: #{tpu_custom_call.1} parent=1 // pred_fallthru
      _
    // Predicated region
    $region6: #{tpu_custom_call.1} parent=1 // pred_check
      _
    $region7: #{tpu_custom_call.1} parent=1 // pred_check_branch
      %14 = sbr.rel (0) target = $region9
    $region8: #{tpu_custom_call.1} parent=1 // pred_region
      _
    $region9: #{tpu_custom_call.1} parent=1 // pred_fallthru
      _
    // Predicated region
    $region10: #{tpu_custom_call.1} parent=1 // pred_check
      _
    $region11: #{tpu_custom_call.1} parent=1 // pred_check_branch
      %16 = sbr.rel (0) target = $region13
    $region12: #{tpu_custom_call.1} parent=1 // pred_region
      _
    $region13: #{tpu_custom_call.1} parent=1 // pred_fallthru
      _
    // Predicated region
    $region14: #{tpu_custom_call.1} parent=1 // pred_check
      _
    $region15: #{tpu_custom_call.1} parent=1 // pred_check_branch
      %18 = sbr.rel (0) target = $region17
    $region16: #{tpu_custom_call.1} parent=1 // pred_region
      _
    $region17: #{tpu_custom_call.1} parent=1 // pred_fallthru
      _
    // Predicated region
    $region18: #{tpu_custom_call.1} parent=1 // pred_check
      _
    $region19: #{tpu_custom_call.1} parent=1 // pred_check_branch
      %20 = sbr.rel (0) target = $region21
    $region20: #{tpu_custom_call.1} parent=1 // pred_region
      _
    $region21: #{tpu_custom_call.1} parent=1 // pred_fallthru
      _
    %v21 = vld [vmem:[%s0] sm:$0xff]
    %v22 = vld [vmem:[%s0 + $0x8] sm:$0xff]
    %v23 = vld [vmem:[%s0 + $0x10] sm:$0xff]
    %v24 = vld [vmem:[%s0 + $0x18] sm:$0xff]
    %v25 = vld [vmem:[%s1] sm:$0xff]
    %v26 = vld [vmem:[%s1 + $0x8] sm:$0xff]
    %v27 = vld [vmem:[%s1 + $0x10] sm:$0xff]
    %v28 = vld [vmem:[%s1 + $0x18] sm:$0xff]
    %v29 = vld [vmem:[%s1 + $0x20] sm:$0xff]
    %v30 = vld [vmem:[%s1 + $0x28] sm:$0xff]
    %v31 = vld [vmem:[%s1 + $0x30] sm:$0xff]
    %v32 = vld [vmem:[%s1 + $0x38] sm:$0xff]
    %v33 = vld [vmem:[%s1 + $0x40] sm:$0xff]
    %v34 = vld [vmem:[%s1 + $0x48] sm:$0xff]
    %v35 = vld [vmem:[%s1 + $0x50] sm:$0xff]
    %v36 = vld [vmem:[%s1 + $0x58] sm:$0xff]
    %v37 = vld [vmem:[%s1 + $0x60] sm:$0xff]
    %v38 = vld [vmem:[%s1 + $0x68] sm:$0xff]
    %v39 = vld [vmem:[%s1 + $0x70] sm:$0xff]
    %v40 = vld [vmem:[%s1 + $0x78] sm:$0xff]
    %v41 = vld [vmem:[%s1 + $0x80] sm:$0xff]
    %v42 = vld [vmem:[%s1 + $0x88] sm:$0xff]
    %v43 = vld [vmem:[%s1 + $0x90] sm:$0xff]
    %v44 = vld [vmem:[%s1 + $0x98] sm:$0xff]
    %v45 = vld [vmem:[%s2] sm:$0x1]
    %v47 = vlaneseq
    %v48 = vshrl.u32 %v47, 7
    %v49 = vsub.s32 0, %v48
    %v50 = vrot.slane %v45, %v49
    %vm52 = vcmask 261120
    %v54 = vsel %vm52, %v22, 0
    %v57 = vsel %vm52, %v24, 0
    %59 = vmatprep.subr.mxu0 0.0
    %60 = vmatpush1.msra.mxu0 %v25
    %61 = vmatprep.subr.mxu0 0.0
    %62 = vmatpush1.msra.mxu0 %v26
    %63 = vmatprep.subr.mxu0 0.0
    %64 = vmatpush1.msra.mxu0 %v27
    %65 = vmatprep.subr.mxu0 0.0
    %66 = vmatpush1.msra.mxu0 %v28
    %67 = vmatprep.subr.mxu0 0.0
    %68 = vmatpush1.msra.mxu0 %v29
    %69 = vmatprep.subr.mxu0 0.0
    %70 = vmatpush1.msra.mxu0 %v30
    %71 = vmatprep.subr.mxu0 0.0
    %72 = vmatpush1.msra.mxu0 %v31
    %73 = vmatprep.subr.mxu0 0.0
    %74 = vmatpush1.msra.mxu0 %v32
    %75 = vmatprep.subr.mxu0 0.0
    %76 = vmatpush1.msra.mxu0 %v33
    %77 = vmatprep.subr.mxu0 0.0
    %78 = vmatpush1.msra.mxu0 %v34
    %79 = vmatprep.subr.mxu0 0.0
    %80 = vmatpush1.msra.mxu0 %v35
    %81 = vmatprep.subr.mxu0 0.0
    %82 = vmatpush1.msra.mxu0 %v36
    %83 = vmatprep.subr.mxu0 0.0
    %84 = vmatpush1.msra.mxu0 %v37
    %85 = vmatprep.subr.mxu0 0.0
    %86 = vmatpush1.msra.mxu0 %v38
    %87 = vmatprep.subr.mxu0 0.0
    %88 = vmatpush1.msra.mxu0 %v39
    %89 = vmatprep.subr.mxu0 0.0
    %90 = vmatpush1.msra.mxu0 %v40
    %91 = vmatprep.subr.mxu0 0.0
    %92 = vmatpush1.msra.mxu0 %v41
    %93 = vmatprep.subr.mxu0 0.0
    %94 = vmatpush1.msra.mxu0 %v42
    %95 = vmatprep.subr.mxu0 0.0
    %96 = vmatpush1.msra.mxu0 %v43
    %97 = vmatprep.subr.mxu0 0.0
    %98 = vmatpush1.msra.mxu0 %v44
    %99 = vmatprep.subr.mxu0 0.0
    %100 = vmatpush1.msra.mxu0 0.0
    %101 = vmatprep.subr.mxu0 0.0
    %102 = vmatpush1.msra.mxu0 0.0
    %103 = vmatprep.subr.mxu0 0.0
    %104 = vmatpush1.msra.mxu0 0.0
    %105 = vmatprep.subr.mxu0 0.0
    %106 = vmatpush1.msra.mxu0 0.0
    %107 = vmatprep.subr.mxu0 0.0
    %108 = vmatpush1.msra.mxu0 0.0
    %109 = vmatprep.subr.mxu0 0.0
    %110 = vmatpush1.msra.mxu0 0.0
    %111 = vmatprep.subr.mxu0 0.0
    %112 = vmatpush1.msra.mxu0 0.0
    %113 = vmatprep.subr.mxu0 0.0
    %114 = vmatpush1.msra.mxu0 0.0
    %115 = vmatprep.subr.mxu0 0.0
    %116 = vmatpush1.msra.mxu0 0.0
    %117 = vmatprep.subr.mxu0 0.0
    %118 = vmatpush1.msra.mxu0 0.0
    %119 = vmatprep.subr.mxu0 0.0
    %120 = vmatpush1.msra.mxu0 0.0
    %121 = vmatprep.subr.mxu0 0.0
    %122 = vmatpush1.msra.mxu0 0.0
    %123 = vmatprep.mubr.f32.mxu0 %v54
    %124 = vmatmul.mubr.f32.gmra.mrb[0].mxu0 %v21
    %v125 = vpop.f32.mrb[0].mxu0
    %v126 = vadd.f32 %v50, %v125
    %v127 = vpop.f32.mrb[0].mxu0
    %128 = vmatprep.mubr.f32.mxu0 %v57
    %129 = vmatmul.mubr.f32.gmra.mrb[0].mxu0 %v23
    %v130 = vpop.f32.mrb[0].mxu0
    %v131 = vadd.f32 %v50, %v130
    %v132 = vpop.f32.mrb[0].mxu0
    %133 = vdwg.mxu0
    %v134 = vmul.f32 %v126, 0.5
    %v135 = vmul.f32 %v131, 0.5
    %v136 = vmul.f32 %v126, 0.70710677
    %v137 = vmul.f32 %v131, 0.70710677
    %v138 = verf.f32.pop %v136
    %v139 = verf.f32.pop %v137
    %v140 = vadd.f32 %v138, 1.0
    %v141 = vadd.f32 %v139, 1.0
    %v142 = vmul.f32 %v134, %v140
    %v143 = vmul.f32 %v135, %v141
    %v144 = vld [vmem:[%s3] sm:$0xff]
    %v145 = vld [vmem:[%s3 + $0x8] sm:$0xff]
    %v146 = vld [vmem:[%s3 + $0x10] sm:$0xff]
    %v147 = vld [vmem:[%s3 + $0x18] sm:$0xff]
    %v148 = vld [vmem:[%s3 + $0x20] sm:$0xff]
    %v149 = vld [vmem:[%s3 + $0x28] sm:$0xff]
    %v150 = vld [vmem:[%s3 + $0x30] sm:$0xff]
    %v151 = vld [vmem:[%s3 + $0x38] sm:$0xff]
    %v152 = vld [vmem:[%s4] sm:$0x3]
    %v154 = vlaneseq
    %v155 = vshrl.u32 %v154, 7
    %v156 = vsub.s32 0, %v155
    %v157 = vrot.slane %v152, %v156
    %v158 = vlaneseq
    %v159 = vshrl.u32 %v158, 7
    %v160 = vsub.s32 1, %v159
    %v161 = vrot.slane %v152, %v160
    %v165 = vsel %vm52, %v142, 0
    %v168 = vsel %vm52, %v143, 0
    %170 = vmatprep.subr.mxu0 %v145
    %171 = vmatpush1.msra.mxu0 %v144
    %172 = vmatprep.subr.mxu0 %v147
    %173 = vmatpush1.msra.mxu0 %v146
    %174 = vmatprep.subr.mxu0 %v149
    %175 = vmatpush1.msra.mxu0 %v148
    %176 = vmatprep.subr.mxu0 %v151
    %177 = vmatpush1.msra.mxu0 %v150
    %178 = vmatprep.subr.mxu0 0.0
    %179 = vmatpush1.msra.mxu0 0.0
    %180 = vmatprep.subr.mxu0 0.0
    %181 = vmatpush1.msra.mxu0 0.0
    %182 = vmatprep.subr.mxu0 0.0
    %183 = vmatpush1.msra.mxu0 0.0
    %184 = vmatprep.subr.mxu0 0.0
    %185 = vmatpush1.msra.mxu0 0.0
    %186 = vmatprep.subr.mxu0 0.0
    %187 = vmatpush1.msra.mxu0 0.0
    %188 = vmatprep.subr.mxu0 0.0
    %189 = vmatpush1.msra.mxu0 0.0
    %190 = vmatprep.subr.mxu0 0.0
    %191 = vmatpush1.msra.mxu0 0.0
    %192 = vmatprep.subr.mxu0 0.0
    %193 = vmatpush1.msra.mxu0 0.0
    %194 = vmatprep.subr.mxu0 0.0
    %195 = vmatpush1.msra.mxu0 0.0
    %196 = vmatprep.subr.mxu0 0.0
    %197 = vmatpush1.msra.mxu0 0.0
    %198 = vmatprep.subr.mxu0 0.0
    %199 = vmatpush1.msra.mxu0 0.0
    %200 = vmatprep.subr.mxu0 0.0
    %201 = vmatpush1.msra.mxu0 0.0
    %202 = vmatprep.subr.mxu0 0.0
    %203 = vmatpush1.msra.mxu0 0.0
    %204 = vmatprep.subr.mxu0 0.0
    %205 = vmatpush1.msra.mxu0 0.0
    %206 = vmatprep.subr.mxu0 0.0
    %207 = vmatpush1.msra.mxu0 0.0
    %208 = vmatprep.subr.mxu0 0.0
    %209 = vmatpush1.msra.mxu0 0.0
    %210 = vmatprep.subr.mxu0 0.0
    %211 = vmatpush1.msra.mxu0 0.0
    %212 = vmatprep.subr.mxu0 0.0
    %213 = vmatpush1.msra.mxu0 0.0
    %214 = vmatprep.subr.mxu0 0.0
    %215 = vmatpush1.msra.mxu0 0.0
    %216 = vmatprep.subr.mxu0 0.0
    %217 = vmatpush1.msra.mxu0 0.0
    %218 = vmatprep.subr.mxu0 0.0
    %219 = vmatpush1.msra.mxu0 0.0
    %220 = vmatprep.subr.mxu0 0.0
    %221 = vmatpush1.msra.mxu0 0.0
    %222 = vmatprep.subr.mxu0 0.0
    %223 = vmatpush1.msra.mxu0 0.0
    %224 = vmatprep.subr.mxu0 0.0
    %225 = vmatpush1.msra.mxu0 0.0
    %226 = vmatprep.subr.mxu0 0.0
    %227 = vmatpush1.msra.mxu0 0.0
    %228 = vmatprep.subr.mxu0 0.0
    %229 = vmatpush1.msra.mxu0 0.0
    %230 = vmatprep.subr.mxu0 0.0
    %231 = vmatpush1.msra.mxu0 0.0
    %232 = vmatprep.subr.mxu0 0.0
    %233 = vmatpush1.msra.mxu0 0.0
    %234 = vmatprep.mubr.f32.mxu0 0.0
    %235 = vmatmul.mubr.f32.gmra.mrb[0].mxu0 %v165
    %v236 = vpop.f32.mrb[0].mxu0
    %v237 = vadd.f32 %v157, %v236
    %v238 = vpop.f32.mrb[0].mxu0
    %v239 = vadd.f32 %v161, %v238
    %240 = vmatprep.mubr.f32.mxu0 0.0
    %241 = vmatmul.mubr.f32.gmra.mrb[0].mxu0 %v168
    %v242 = vpop.f32.mrb[0].mxu0
    %v243 = vadd.f32 %v157, %v242
    %v244 = vpop.f32.mrb[0].mxu0
    %v245 = vadd.f32 %v161, %v244
    %246 = vdwg.mxu0
    %v247 = vadd.f32 %v21, %v237
    %v248 = vadd.f32 %v22, %v239
    %v249 = vadd.f32 %v23, %v243
    %v250 = vadd.f32 %v24, %v245
    %251 = vst [vmem:[#allocation2] sm:$0xff] %v247
    %252 = vst.msk [vmem:[#allocation2 + $0x8] sm:$0xff] %vm52, %v248
    %253 = vst [vmem:[#allocation2 + $0x10] sm:$0xff] %v249
    %254 = vst.msk [vmem:[#allocation2 + $0x18] sm:$0xff] %vm52, %v250
    // Predicated region
    $region22: #{tpu_custom_call.1} parent=1 // pred_check
      _
    $region23: #{tpu_custom_call.1} parent=1 // pred_check_branch
      %256 = sbr.rel (0) target = $region25
    $region24: #{tpu_custom_call.1} parent=1 // pred_region
      %s258 = ssub.s32 512, 512
      %259 = vsyncadd [#allocation3], %s258
      %s260 = sshll.u32 [#allocation2], 4
      %s261 = int_to_ptr.vmem [resolvable:$true] %s260
      %266 = dma.vmem_to_hbm [thread:$0]  %s261, 512, %s5, [#allocation3], 256, 256, 16
    $region25: #{tpu_custom_call.1} parent=1 // pred_fallthru
      _
    // Predicated region
    $region26: #{tpu_custom_call.1} parent=1 // pred_check
      _
    $region27: #{tpu_custom_call.1} parent=1 // pred_check_branch
      %268 = sbr.rel (0) target = $region29
    $region28: #{tpu_custom_call.1} parent=1 // pred_region
      %269 = dma.done [#allocation3], 512
    $region29: #{tpu_custom_call.1} parent=1 // pred_fallthru
      _
    %270 = vsyncpa [#allocation3], 1

</llo_original>
